<compile_context>
chip_gen: v7x
topology: tpu7x:2x2x1
jax: 0.10.0
libtpu: 0.0.40
codegen_flags: <defaults>
</compile_context>

<pallas_src>
import jax
import jax.numpy as jnp
from jax.experimental import pallas as pl
from jax.experimental.pallas import tpu as pltpu

_LANE = 128
_SUBLANE = 8


def _minimum_kernel(x_ref, y_ref, o_ref):
    # Lane-dense tiles; one VPU minimum per vreg.
    o_ref[...] = jnp.minimum(x_ref[...], y_ref[...])


def _round_up(n: int, m: int) -> int:
    return -(-n // m) * m


def _pick_row_block(total_rows: int, max_rows: int) -> int:
    """Row-block size: multiple of 8 (or the full extent), <= max_rows, and
    capped so the grid has >= 2 steps (both v7x TensorCores get work)."""
    if total_rows <= _SUBLANE:
        return total_rows  # block dim == full array dim satisfies tiling rule
    half = _round_up(pl.cdiv(total_rows, 2), _SUBLANE)
    return max(_SUBLANE, min(max_rows, half))


def _run_min(x2: jax.Array, y2: jax.Array, brows: int) -> jax.Array:
    rows, n_cols = x2.shape
    total = rows * n_cols
    grid = (pl.cdiv(rows, brows),)
    return pl.pallas_call(
        _minimum_kernel,
        out_shape=jax.ShapeDtypeStruct((rows, n_cols), x2.dtype),
        grid=grid,
        in_specs=[
            pl.BlockSpec((brows, n_cols), lambda i: (i, 0)),
            pl.BlockSpec((brows, n_cols), lambda i: (i, 0)),
        ],
        out_specs=pl.BlockSpec((brows, n_cols), lambda i: (i, 0)),
        compiler_params=pltpu.CompilerParams(
            dimension_semantics=("parallel",),  # megacore sharding on v7x
        ),
        cost_estimate=pl.CostEstimate(
            flops=total,
            transcendentals=0,
            bytes_accessed=3 * total * x2.dtype.itemsize,
        ),
    )(x2, y2)


def elementwise_minimum(x: jax.Array, y: jax.Array, *, block_rows: int = 8192) -> jax.Array:
    """Elementwise minimum of two same-shaped float32 tensors (torch.minimum)."""
    assert x.shape == y.shape, "same-shape elementwise minimum"
    assert x.dtype == y.dtype
    orig_shape = x.shape
    total = x.size

    if total % _LANE == 0:
        # Fast path: free reshape to a lane-dense [rows, 128] slab; no pad, no
        # output slice (removes ~2x extra HBM traffic of the old pad path).
        rows = total // _LANE
        x2 = x.reshape(rows, _LANE)
        y2 = y.reshape(rows, _LANE)
        brows = _pick_row_block(rows, block_rows)
        # NOTE: if rows % brows != 0 the last grid block reads past the end of
        # the slab; safe here because the op is elementwise and Pallas masks
        # the out-of-bounds writeback — do not copy this pattern into a
        # reduction kernel.
        out2 = _run_min(x2, y2, brows)
        return out2.reshape(orig_shape)

    # Unaligned fallback (total not a multiple of 128): tile the original 2-D
    # array directly with the full last dim — still no pad/slice HBM copies;
    # only the lane-masked stores cost a little on this rare path.
    assert x.ndim == 2, "module spec is 2-D ([-1, -1], float32)"
    M, N = orig_shape
    # Aim for ~4 MiB per input buffer, multiple-of-8 rows, >= 2 grid steps.
    rows_for_4mib = max(
        _SUBLANE,
        ((4 << 20) // max(1, N * x.dtype.itemsize)) // _SUBLANE * _SUBLANE,
    )
    bm = _pick_row_block(M, min(block_rows, rows_for_4mib))
    return _run_min(x, y, bm)


if __name__ == "__main__":
    key = jax.random.PRNGKey(0)
    kx, ky = jax.random.split(key)

    # Aligned fast path: 16*48 = 768 elements (multiple of 128 -> no pad/slice).
    M, N = 16, 48
    x = jax.random.normal(kx, (M, N), dtype=jnp.float32)
    y = jax.random.normal(ky, (M, N), dtype=jnp.float32)
    out = elementwise_minimum(x, y)
    jax.block_until_ready(out)
    ref = jnp.minimum(x, y)
    assert out.shape == ref.shape and out.dtype == ref.dtype
    assert jnp.array_equal(out, ref)

    # Unaligned fallback path: 7*13 = 91 elements (not a multiple of 128).
    xu = jax.random.normal(kx, (7, 13), dtype=jnp.float32)
    yu = jax.random.normal(ky, (7, 13), dtype=jnp.float32)
    outu = elementwise_minimum(xu, yu)
    jax.block_until_ready(outu)
    assert jnp.array_equal(outu, jnp.minimum(xu, yu))

    print("KERNEL_OK")
</pallas_src>

<mosaic_0001>
module attributes {stable_mosaic.version = 11 : i64} {
  func.func @_minimum_kernel(%arg0: i32, %arg1: memref<6x128xf32, #tpu.memory_space<vmem>>, %arg2: memref<6x128xf32, #tpu.memory_space<vmem>>, %arg3: memref<6x128xf32, #tpu.memory_space<vmem>>) attributes {dimension_semantics = [#tpu.dimension_semantics<parallel>], iteration_bounds = array<i64: 1>, scalar_prefetch = 0 : i64, scratch_operands = 0 : i64, tpu.core_type = #tpu.core_type<tc>, window_params = [{transform_indices = @transform_0, window_bounds = array<i64: 6, 128>}, {transform_indices = @transform_1, window_bounds = array<i64: 6, 128>}, {transform_indices = @transform_2, window_bounds = array<i64: 6, 128>}]} {
    %c0 = arith.constant 0 : index
    %c0_0 = arith.constant 0 : index
    %0 = vector.load %arg1[%c0, %c0_0] : memref<6x128xf32, #tpu.memory_space<vmem>>, vector<6x128xf32>
    %c0_1 = arith.constant 0 : index
    %c0_2 = arith.constant 0 : index
    %1 = vector.load %arg2[%c0_1, %c0_2] : memref<6x128xf32, #tpu.memory_space<vmem>>, vector<6x128xf32>
    %2 = arith.minimumf %0, %1 : vector<6x128xf32>
    %c0_3 = arith.constant 0 : index
    %c0_4 = arith.constant 0 : index
    %3 = vector.load %arg3[%c0_3, %c0_4] : memref<6x128xf32, #tpu.memory_space<vmem>>, vector<6x128xf32>
    tpu.vector_store %arg3[%c0_3, %c0_4], %2 {strides = array<i32>} : memref<6x128xf32, #tpu.memory_space<vmem>>, vector<6x128xf32>,
    return
  }
  func.func @transform_0(%arg0: i32) -> (i32, i32) {
    %c0_i32 = arith.constant 0 : i32
    %c0_i32_0 = arith.constant 0 : i32
    return %arg0, %c0_i32 : i32, i32
  }
  func.func @transform_1(%arg0: i32) -> (i32, i32) {
    %c0_i32 = arith.constant 0 : i32
    %c0_i32_0 = arith.constant 0 : i32
    return %arg0, %c0_i32 : i32, i32
  }
  func.func @transform_2(%arg0: i32) -> (i32, i32) {
    %c0_i32 = arith.constant 0 : i32
    %c0_i32_0 = arith.constant 0 : i32
    return %arg0, %c0_i32 : i32, i32
  }
}

</mosaic_0001>

<llo_original>
// kernel: tpu_custom_call.1
$region0: #{tpu_custom_call.1}
  #allocation0 [shape = 'u32[]', space=smem, size = 0x4, offset = 0x4, fixed_abs, tag = 'smem constant byte address 0x4 - core index']
  #allocation1 [shape = 'u32[144,128]{1,0:T(1,128)}', space=vmem, size = 0x12000, scoped, tag = 'internal scratch']
  %s0 = inlined_call_operand.hbm [shape: f32[6,128], index: 0, kind: input, shape index: {}]
  %s1 = inlined_call_operand.hbm [shape: f32[6,128], index: 1, kind: input, shape index: {}]
  %s2 = inlined_call_operand.hbm [shape: f32[6,128], index: 2, kind: output, shape index: {}]
  %s3 = sld [smem:[#allocation0]]
  $region26: #{tpu_custom_call.1} parent=0
    _
  %s5 = ssub.s32 1, %s3
  %s6 = scalar_select 0, %s5, %s3
  $region1: #{tpu_custom_call.1} parent=0
    #allocation2 [shape = 'u8[4096]{0}', space=vmem, size = 0x1000, scoped, tag = 'input window, operand 0, single buffered']
    #allocation3 [shape = 's32[1]{0}', space=sflag, size = 0x4, scoped, tag = 'scoped memory for tpu_custom_call.1']
    #allocation4 [shape = 's32[1]{0}', space=sflag, size = 0x4, scoped, tag = 'scoped memory for tpu_custom_call.1']
    #allocation5 [shape = 'u8[4096]{0}', space=vmem, size = 0x1000, scoped, tag = 'input window, operand 1, single buffered']
    #allocation6 [shape = 's32[1]{0}', space=sflag, size = 0x4, scoped, tag = 'scoped memory for tpu_custom_call.1']
    #allocation7 [shape = 'u8[4096]{0}', space=vmem, size = 0x1000, scoped, tag = 'output window, operand 0, single buffered']
    %7 = vsyncpa [#allocation3], 0
    %8 = vsyncpa [#allocation6], 0
    %9 = vsyncpa [#allocation4], 0
    // Predicated region
    $region2: #{tpu_custom_call.1} parent=1 // pred_check
      _
    $region3: #{tpu_custom_call.1} parent=1 // pred_check_branch
      %11 = sbr.rel (0) target = $region5
    $region4: #{tpu_custom_call.1} parent=1 // pred_region
      %s13 = ssub.s32 128, 128
      %14 = vsyncadd [#allocation3], %s13
      %s16 = sshll.u32 [#allocation2], 4
      %s17 = int_to_ptr.vmem [resolvable:$true] %s16
      %19 = dma.hbm_to_vmem [thread:$0]  %s0, 128, %s17, [#allocation3]
    $region5: #{tpu_custom_call.1} parent=1 // pred_fallthru
      _
    // Predicated region
    $region6: #{tpu_custom_call.1} parent=1 // pred_check
      _
    $region7: #{tpu_custom_call.1} parent=1 // pred_check_branch
      %21 = sbr.rel (0) target = $region9
    $region8: #{tpu_custom_call.1} parent=1 // pred_region
      %s23 = ssub.s32 128, 128
      %24 = vsyncadd [#allocation6], %s23
      %s26 = sshll.u32 [#allocation5], 4
      %s27 = int_to_ptr.vmem [resolvable:$true] %s26
      %29 = dma.hbm_to_vmem [thread:$0]  %s1, 128, %s27, [#allocation6]
    $region9: #{tpu_custom_call.1} parent=1 // pred_fallthru
      _
    // Predicated region
    $region10: #{tpu_custom_call.1} parent=1 // pred_check
      _
    $region11: #{tpu_custom_call.1} parent=1 // pred_check_branch
      %31 = sbr.rel (0) target = $region13
    $region12: #{tpu_custom_call.1} parent=1 // pred_region
      %32 = dma.done [#allocation3], 128
    $region13: #{tpu_custom_call.1} parent=1 // pred_fallthru
      _
    // Predicated region
    $region14: #{tpu_custom_call.1} parent=1 // pred_check
      _
    $region15: #{tpu_custom_call.1} parent=1 // pred_check_branch
      %34 = sbr.rel (0) target = $region17
    $region16: #{tpu_custom_call.1} parent=1 // pred_region
      %35 = dma.done [#allocation6], 128
    $region17: #{tpu_custom_call.1} parent=1 // pred_fallthru
      _
    %v36 = vld [vmem:[#allocation2] sm:$0x3f]
    %v37 = vld [vmem:[#allocation5] sm:$0x3f]
    %v38 = vmin.f32 %v36, %v37
    %39 = vst [vmem:[#allocation7] sm:$0x3f] %v38
    // Predicated region
    $region18: #{tpu_custom_call.1} parent=1 // pred_check
      _
    $region19: #{tpu_custom_call.1} parent=1 // pred_check_branch
      %41 = sbr.rel (0) target = $region21
    $region20: #{tpu_custom_call.1} parent=1 // pred_region
      %s43 = ssub.s32 128, 128
      %44 = vsyncadd [#allocation4], %s43
      %s46 = sshll.u32 [#allocation7], 4
      %s47 = int_to_ptr.vmem [resolvable:$true] %s46
      %49 = dma.vmem_to_hbm [thread:$0]  %s47, 128, %s2, [#allocation4]
    $region21: #{tpu_custom_call.1} parent=1 // pred_fallthru
      _
    // Predicated region
    $region22: #{tpu_custom_call.1} parent=1 // pred_check
      _
    $region23: #{tpu_custom_call.1} parent=1 // pred_check_branch
      %51 = sbr.rel (0) target = $region25
    $region24: #{tpu_custom_call.1} parent=1 // pred_region
      %52 = dma.done [#allocation4], 128
    $region25: #{tpu_custom_call.1} parent=1 // pred_fallthru
      _
    %53 = vsyncpa [#allocation3], 1
    %54 = vsyncpa [#allocation6], 1
    %55 = vsyncpa [#allocation4], 1

</llo_original>
